<compile_context>
chip_gen: v6e
topology: v6e:2x2x1
jax: 0.10.0
libtpu: 0.0.40
codegen_flags: <defaults>
</compile_context>

<pallas_src>
import jax
import jax.numpy as jnp
from jax.experimental import pallas as pl
from jax.experimental.pallas import tpu as pltpu

# Layer sizes of the PyTorch module.
IN_FEATURES = 768
H1, H2, H3, OUT = 100, 20, 4, 1

# PyTorch SELU constants (torch.nn.functional.selu).
_SELU_ALPHA = 1.6732632423543772848170429916717
_SELU_SCALE = 1.0507009873554804934193349852946

# Packed "tail" parameter layout: everything except w1 lives in one (96, 128) f32
# array. Every segment starts at lane 0 and at a sublane offset that is a
# multiple of 8, so the in-kernel unpacking is cheap, aligned value slicing.
_TAIL_SHAPE = (96, 128)
_W2_R = 0    # [ 0:20, 0:100]  w2  (out, in) = (20, 100)
_W3_R = 24   # [24:28, 0:20 ]  w3  (4, 20)
_B2_R = 32   # [32:52, 0:1  ]  b2  column (20, 1)
_B3_R = 56   # [56:60, 0:1  ]  b3  column (4, 1)
_W4_R = 64   # [64:68, 0:1  ]  w4  column (4, 1)   (torch weight (1, 4))
_B4_R = 72   # [72:73, 0:1  ]  b4  (1, 1)
_B1_R = 80   # [80:81, 0:100]  b1  row (1, 100)


def _selu(v):
    # exp(min(v, 0)) keeps the unselected branch finite (jnp.where evaluates both).
    return _SELU_SCALE * jnp.where(
        v > 0, v, _SELU_ALPHA * (jnp.exp(jnp.minimum(v, 0.0)) - 1.0))


def _round_up(n, m):
    return ((n + m - 1) // m) * m


def mlp_kernel(x_ref, w1_ref, tail_ref, o_ref):
    x = x_ref[...]          # (TILE_B, 768) f32, batch-major
    tail = tail_ref[...]    # (96, 128) f32 packed small params

    # Unpack small parameters (static slices of a loaded value; no data movement
    # beyond tiny aligned relayouts).
    w2 = tail[_W2_R:_W2_R + H2, 0:H1]        # (20, 100)
    w3 = tail[_W3_R:_W3_R + H3, 0:H2]        # (4, 20)
    b2 = tail[_B2_R:_B2_R + H2, 0:1]         # (20, 1)
    b3 = tail[_B3_R:_B3_R + H3, 0:1]         # (4, 1)
    w4 = tail[_W4_R:_W4_R + H3, 0:1]         # (4, 1)
    b4 = tail[_B4_R:_B4_R + 1, 0:1]          # (1, 1)
    b1 = tail[_B1_R:_B1_R + 1, 0:H1]         # (1, 100)

    # Layer 1: the only sizeable matmul, batch-major on the MXU.
    h1 = jnp.dot(x, w1_ref[...], preferred_element_type=jnp.float32) + b1
    h1 = _selu(h1)                           # (TILE_B, 100)

    # Switch to feature-major (features on sublanes, batch on lanes): narrow
    # layers stop padding to 128 lanes and the final store becomes lane-dense.
    h1t = h1.T                               # (100, TILE_B)

    h2 = _selu(jnp.dot(w2, h1t, preferred_element_type=jnp.float32) + b2)   # (20, TILE_B)
    h3 = _selu(jnp.dot(w3, h2, preferred_element_type=jnp.float32) + b3)    # (4, TILE_B)

    # Final 4 -> 1 layer on the VPU/XLU: broadcast-multiply + sublane reduction.
    logits = jnp.sum(w4 * h3, axis=0, keepdims=True) + b4                   # (1, TILE_B)
    o_ref[...] = 1.0 / (1.0 + jnp.exp(-logits))                             # sigmoid


def net_forward(x, packed, *, tile_b=1024):
    """x: (B, 768) f32.  packed: {"w1": (768, 100) f32, "tail": (96, 128) f32}."""
    B, F = x.shape
    assert F == IN_FEATURES, f"expected {IN_FEATURES} input features, got {F}"

    # Batch tile: multiple of 128 (lane-dense (1, TILE_B) output blocks), capped so
    # the double-buffered (TILE_B, 768) f32 input tile stays well inside VMEM on
    # every generation (v7x has only 64 MiB per TensorCore).
    tile_b = _round_up(max(tile_b, 128), 128)
    tb = min(tile_b, _round_up(B, 128))
    b_pad = _round_up(B, tb)
    if b_pad != B:
        x = jnp.pad(x, ((0, b_pad - B), (0, 0)))
    grid = (b_pad // tb,)

    out = pl.pallas_call(
        mlp_kernel,
        out_shape=jax.ShapeDtypeStruct((1, b_pad), jnp.float32),
        grid_spec=pltpu.PrefetchScalarGridSpec(
            num_scalar_prefetch=0,
            grid=grid,
            in_specs=[
                # Batch tile of the input: streamed + double-buffered.
                pl.BlockSpec((tb, IN_FEATURES), lambda i: (i, 0)),
                # Weights: constant block index => fetched once, resident across tiles.
                pl.BlockSpec((IN_FEATURES, H1), lambda i: (0, 0)),
                pl.BlockSpec(_TAIL_SHAPE, lambda i: (0, 0)),
            ],
            out_specs=pl.BlockSpec((1, tb), lambda i: (0, i)),
        ),
        compiler_params=pltpu.CompilerParams(
            dimension_semantics=("parallel",),   # split batch tiles across TCs (v7x)
            vmem_limit_bytes=48 * 1024 * 1024,
        ),
    )(x, packed["w1"], packed["tail"])

    # (1, B_pad) -> (B, 1): pure slice + reshape, no data reordering.
    return out[0, :B].reshape(B, 1)


def init_params(key):
    """Deterministic init mimicking torch.nn.Linear: weight (out, in), bias (out,)."""
    dims = [(IN_FEATURES, H1), (H1, H2), (H2, H3), (H3, OUT)]
    params = {}
    for i, (fan_in, fan_out) in enumerate(dims, start=1):
        key, kw, kb = jax.random.split(key, 3)
        bound = 1.0 / jnp.sqrt(fan_in)
        params[f"w{i}"] = jax.random.uniform(kw, (fan_out, fan_in), jnp.float32, -bound, bound)
        params[f"b{i}"] = jax.random.uniform(kb, (fan_out,), jnp.float32, -bound, bound)
    return params


def pack_params(p):
    """Torch-layout params -> kernel operands: w1 as (in, out) plus one packed tail."""
    tail = jnp.zeros(_TAIL_SHAPE, jnp.float32)
    tail = tail.at[_W2_R:_W2_R + H2, 0:H1].set(p["w2"])
    tail = tail.at[_W3_R:_W3_R + H3, 0:H2].set(p["w3"])
    tail = tail.at[_B2_R:_B2_R + H2, 0].set(p["b2"])
    tail = tail.at[_B3_R:_B3_R + H3, 0].set(p["b3"])
    tail = tail.at[_W4_R:_W4_R + H3, 0].set(p["w4"][0])
    tail = tail.at[_B4_R, 0].set(p["b4"][0])
    tail = tail.at[_B1_R, 0:H1].set(p["b1"])
    return {"w1": p["w1"].T, "tail": tail}


def _reference(x, p):
    h = x
    for i in (1, 2, 3):
        h = _selu(h @ p[f"w{i}"].T + p[f"b{i}"])
    return jax.nn.sigmoid(h @ p["w4"].T + p["b4"])


if __name__ == "__main__":
    key = jax.random.PRNGKey(0)
    kx, kp = jax.random.split(key)

    params = init_params(kp)
    packed = pack_params(params)

    # Small batch: single tile (padded to 128 rows).
    B = 8
    x = jax.random.normal(kx, (B, IN_FEATURES), dtype=jnp.float32)
    out = net_forward(x, packed)
    jax.block_until_ready(out)
    ref = _reference(x, params)
    assert out.shape == (B, 1)
    assert jnp.allclose(out, ref, atol=1e-5, rtol=1e-5), float(jnp.max(jnp.abs(out - ref)))

    # Multi-tile grid: non-multiple batch + small tile exercises padding, the
    # "parallel" batch axis and weight residency across tiles.
    B2 = 300
    x2 = jax.random.normal(jax.random.fold_in(kx, 1), (B2, IN_FEATURES), dtype=jnp.float32)
    out2 = net_forward(x2, packed, tile_b=128)
    jax.block_until_ready(out2)
    ref2 = _reference(x2, params)
    assert out2.shape == (B2, 1)
    assert jnp.allclose(out2, ref2, atol=1e-5, rtol=1e-5), float(jnp.max(jnp.abs(out2 - ref2)))

    print("KERNEL_OK")
</pallas_src>

<mosaic_0001>
module attributes {stable_mosaic.version = 11 : i64} {
  func.func @mlp_kernel(%arg0: i32, %arg1: memref<128x768xf32, #tpu.memory_space<vmem>>, %arg2: memref<768x100xf32, #tpu.memory_space<vmem>>, %arg3: memref<96x128xf32, #tpu.memory_space<vmem>>, %arg4: memref<1x128xf32, #tpu.memory_space<vmem>>) attributes {dimension_semantics = [#tpu.dimension_semantics<parallel>], iteration_bounds = array<i64: 1>, scalar_prefetch = 0 : i64, scratch_operands = 0 : i64, tpu.core_type = #tpu.core_type<tc>, window_params = [{transform_indices = @transform_0, window_bounds = array<i64: 128, 768>}, {pipeline_mode = #tpu.pipeline_mode<synchronous>, transform_indices = @transform_1, window_bounds = array<i64: 768, 100>}, {pipeline_mode = #tpu.pipeline_mode<synchronous>, transform_indices = @transform_2, window_bounds = array<i64: 96, 128>}, {transform_indices = @transform_3, window_bounds = array<i64: 1, 128>}]} {
    %c0 = arith.constant 0 : index
    %c0_0 = arith.constant 0 : index
    %0 = vector.load %arg1[%c0, %c0_0] : memref<128x768xf32, #tpu.memory_space<vmem>>, vector<128x768xf32>
    %c0_1 = arith.constant 0 : index
    %c0_2 = arith.constant 0 : index
    %1 = vector.load %arg3[%c0_1, %c0_2] : memref<96x128xf32, #tpu.memory_space<vmem>>, vector<96x128xf32>
    %2 = vector.extract_strided_slice %1 {offsets = [0, 0], sizes = [20, 100], strides = [1, 1]} : vector<96x128xf32> to vector<20x100xf32>
    %3 = vector.extract_strided_slice %1 {offsets = [24, 0], sizes = [4, 20], strides = [1, 1]} : vector<96x128xf32> to vector<4x20xf32>
    %4 = vector.extract_strided_slice %1 {offsets = [32, 0], sizes = [20, 1], strides = [1, 1]} : vector<96x128xf32> to vector<20x1xf32>
    %5 = vector.extract_strided_slice %1 {offsets = [56, 0], sizes = [4, 1], strides = [1, 1]} : vector<96x128xf32> to vector<4x1xf32>
    %6 = vector.extract_strided_slice %1 {offsets = [64, 0], sizes = [4, 1], strides = [1, 1]} : vector<96x128xf32> to vector<4x1xf32>
    %7 = vector.extract_strided_slice %1 {offsets = [72, 0], sizes = [1, 1], strides = [1, 1]} : vector<96x128xf32> to vector<1x1xf32>
    %8 = vector.extract_strided_slice %1 {offsets = [80, 0], sizes = [1, 100], strides = [1, 1]} : vector<96x128xf32> to vector<1x100xf32>
    %c0_3 = arith.constant 0 : index
    %c0_4 = arith.constant 0 : index
    %9 = vector.load %arg2[%c0_3, %c0_4] : memref<768x100xf32, #tpu.memory_space<vmem>>, vector<768x100xf32>
    %cst = arith.constant dense<0.000000e+00> : vector<128x100xf32>
    %10 = tpu.matmul %0, %9, %cst {dimension_numbers = #tpu.dot_dimension_numbers<[1], [0], [0], [1], [0, 0, 1, 1], [], []>} : vector<128x768xf32>, vector<768x100xf32>, vector<128x100xf32> -> vector<128x100xf32>
    %11 = vector.broadcast %8 : vector<1x100xf32> to vector<128x100xf32>
    %12 = arith.addf %10, %11 : vector<128x100xf32>
    %cst_5 = arith.constant 0.000000e+00 : f32
    %13 = vector.broadcast %cst_5 : f32 to vector<128x100xf32>
    %14 = arith.cmpf ogt, %12, %13 : vector<128x100xf32>
    %cst_6 = arith.constant 0.000000e+00 : f32
    %15 = vector.broadcast %cst_6 : f32 to vector<128x100xf32>
    %16 = arith.minimumf %12, %15 : vector<128x100xf32>
    %17 = math.exp %16 : vector<128x100xf32>
    %cst_7 = arith.constant 1.000000e+00 : f32
    %18 = vector.broadcast %cst_7 : f32 to vector<128x100xf32>
    %19 = arith.subf %17, %18 : vector<128x100xf32>
    %cst_8 = arith.constant 1.67326319 : f32
    %20 = vector.broadcast %cst_8 : f32 to vector<128x100xf32>
    %21 = arith.mulf %20, %19 : vector<128x100xf32>
    %22 = arith.select %14, %12, %21 : vector<128x100xi1>, vector<128x100xf32>
    %cst_9 = arith.constant 1.05070102 : f32
    %23 = vector.broadcast %cst_9 : f32 to vector<128x100xf32>
    %24 = arith.mulf %23, %22 : vector<128x100xf32>
    %25 = tpu.transpose %24, [1, 0] : vector<128x100xf32> -> vector<100x128xf32>
    %cst_10 = arith.constant dense<0.000000e+00> : vector<20x128xf32>
    %26 = tpu.matmul %2, %25, %cst_10 {dimension_numbers = #tpu.dot_dimension_numbers<[1], [0], [0], [1], [0, 0, 1, 1], [], []>} : vector<20x100xf32>, vector<100x128xf32>, vector<20x128xf32> -> vector<20x128xf32>
    %27 = vector.broadcast %4 : vector<20x1xf32> to vector<20x128xf32>
    %28 = arith.addf %26, %27 : vector<20x128xf32>
    %cst_11 = arith.constant 0.000000e+00 : f32
    %29 = vector.broadcast %cst_11 : f32 to vector<20x128xf32>
    %30 = arith.cmpf ogt, %28, %29 : vector<20x128xf32>
    %cst_12 = arith.constant 0.000000e+00 : f32
    %31 = vector.broadcast %cst_12 : f32 to vector<20x128xf32>
    %32 = arith.minimumf %28, %31 : vector<20x128xf32>
    %33 = math.exp %32 : vector<20x128xf32>
    %cst_13 = arith.constant 1.000000e+00 : f32
    %34 = vector.broadcast %cst_13 : f32 to vector<20x128xf32>
    %35 = arith.subf %33, %34 : vector<20x128xf32>
    %cst_14 = arith.constant 1.67326319 : f32
    %36 = vector.broadcast %cst_14 : f32 to vector<20x128xf32>
    %37 = arith.mulf %36, %35 : vector<20x128xf32>
    %38 = arith.select %30, %28, %37 : vector<20x128xi1>, vector<20x128xf32>
    %cst_15 = arith.constant 1.05070102 : f32
    %39 = vector.broadcast %cst_15 : f32 to vector<20x128xf32>
    %40 = arith.mulf %39, %38 : vector<20x128xf32>
    %cst_16 = arith.constant dense<0.000000e+00> : vector<4x128xf32>
    %41 = tpu.matmul %3, %40, %cst_16 {dimension_numbers = #tpu.dot_dimension_numbers<[1], [0], [0], [1], [0, 0, 1, 1], [], []>} : vector<4x20xf32>, vector<20x128xf32>, vector<4x128xf32> -> vector<4x128xf32>
    %42 = vector.broadcast %5 : vector<4x1xf32> to vector<4x128xf32>
    %43 = arith.addf %41, %42 : vector<4x128xf32>
    %cst_17 = arith.constant 0.000000e+00 : f32
    %44 = vector.broadcast %cst_17 : f32 to vector<4x128xf32>
    %45 = arith.cmpf ogt, %43, %44 : vector<4x128xf32>
    %cst_18 = arith.constant 0.000000e+00 : f32
    %46 = vector.broadcast %cst_18 : f32 to vector<4x128xf32>
    %47 = arith.minimumf %43, %46 : vector<4x128xf32>
    %48 = math.exp %47 : vector<4x128xf32>
    %cst_19 = arith.constant 1.000000e+00 : f32
    %49 = vector.broadcast %cst_19 : f32 to vector<4x128xf32>
    %50 = arith.subf %48, %49 : vector<4x128xf32>
    %cst_20 = arith.constant 1.67326319 : f32
    %51 = vector.broadcast %cst_20 : f32 to vector<4x128xf32>
    %52 = arith.mulf %51, %50 : vector<4x128xf32>
    %53 = arith.select %45, %43, %52 : vector<4x128xi1>, vector<4x128xf32>
    %cst_21 = arith.constant 1.05070102 : f32
    %54 = vector.broadcast %cst_21 : f32 to vector<4x128xf32>
    %55 = arith.mulf %54, %53 : vector<4x128xf32>
    %56 = vector.broadcast %6 : vector<4x1xf32> to vector<4x128xf32>
    %57 = arith.mulf %56, %55 : vector<4x128xf32>
    %cst_22 = arith.constant dense<0.000000e+00> : vector<128xf32>
    %58 = vector.multi_reduction <add>, %57, %cst_22 [0] : vector<4x128xf32> to vector<128xf32>
    %59 = vector.shape_cast %58 : vector<128xf32> to vector<1x128xf32>
    %60 = vector.broadcast %7 : vector<1x1xf32> to vector<1x128xf32>
    %61 = arith.addf %59, %60 : vector<1x128xf32>
    %cst_23 = arith.constant 0.000000e+00 : f32
    %62 = vector.broadcast %cst_23 : f32 to vector<1x128xf32>
    %63 = arith.subf %62, %61 : vector<1x128xf32>
    %64 = math.exp %63 : vector<1x128xf32>
    %cst_24 = arith.constant 1.000000e+00 : f32
    %65 = vector.broadcast %cst_24 : f32 to vector<1x128xf32>
    %66 = arith.addf %65, %64 : vector<1x128xf32>
    %cst_25 = arith.constant 1.000000e+00 : f32
    %67 = vector.broadcast %cst_25 : f32 to vector<1x128xf32>
    %68 = arith.divf %67, %66 : vector<1x128xf32>
    %c0_26 = arith.constant 0 : index
    %c0_27 = arith.constant 0 : index
    %69 = vector.load %arg4[%c0_26, %c0_27] : memref<1x128xf32, #tpu.memory_space<vmem>>, vector<1x128xf32>
    tpu.vector_store %arg4[%c0_26, %c0_27], %68 {strides = array<i32>} : memref<1x128xf32, #tpu.memory_space<vmem>>, vector<1x128xf32>,
    return
  }
  func.func @transform_0(%arg0: i32) -> (i32, i32) {
    %c0_i32 = arith.constant 0 : i32
    %c0_i32_0 = arith.constant 0 : i32
    return %arg0, %c0_i32 : i32, i32
  }
  func.func @transform_1(%arg0: i32) -> (i32, i32) {
    %c0_i32 = arith.constant 0 : i32
    %c0_i32_0 = arith.constant 0 : i32
    %c0_i32_1 = arith.constant 0 : i32
    return %c0_i32, %c0_i32_0 : i32, i32
  }
  func.func @transform_2(%arg0: i32) -> (i32, i32) {
    %c0_i32 = arith.constant 0 : i32
    %c0_i32_0 = arith.constant 0 : i32
    %c0_i32_1 = arith.constant 0 : i32
    return %c0_i32, %c0_i32_0 : i32, i32
  }
  func.func @transform_3(%arg0: i32) -> (i32, i32) {
    %c0_i32 = arith.constant 0 : i32
    %c0_i32_0 = arith.constant 0 : i32
    return %c0_i32, %arg0 : i32, i32
  }
}

</mosaic_0001>

<llo_original>
// kernel: tpu_custom_call.1
$region0: #{tpu_custom_call.1}
  #allocation0 [shape = 'u32[]', space=smem, size = 0x4, offset = 0x4, fixed_abs, tag = 'smem constant byte address 0x4 - core index']
  #allocation1 [shape = 'u32[144,128]{1,0:T(1,128)}', space=vmem, size = 0x12000, scoped, tag = 'internal scratch']
  %s0 = inlined_call_operand.vmem [shape: f32[128,768], index: 0, kind: input, shape index: {}]
  %s1 = inlined_call_operand.vmem [shape: f32[768,100], index: 1, kind: input, shape index: {}]
  %s2 = inlined_call_operand.vmem [shape: f32[96,128], index: 2, kind: input, shape index: {}]
  %s3 = inlined_call_operand.hbm [shape: f32[1,128], index: 3, kind: output, shape index: {}]
  %s4 = sld [smem:[#allocation0]]
  $region22: #{tpu_custom_call.1} parent=0
    _
  %s6 = ssub.s32 1, %s4
  %s7 = scalar_select 0, %s6, %s4
  $region1: #{tpu_custom_call.1} parent=0
    #allocation2 [shape = 'u8[512]{0}', space=vmem, size = 0x400, scoped, tag = 'output window, operand 0, single buffered']
    #allocation3 [shape = 's32[1]{0}', space=sflag, size = 0x4, scoped, tag = 'scoped memory for tpu_custom_call.1']
    %8 = vsyncpa [#allocation3], 0
    // Predicated region
    $region2: #{tpu_custom_call.1} parent=1 // pred_check
      _
    $region3: #{tpu_custom_call.1} parent=1 // pred_check_branch
      %10 = sbr.rel (0) target = $region5
    $region4: #{tpu_custom_call.1} parent=1 // pred_region
      _
    $region5: #{tpu_custom_call.1} parent=1 // pred_fallthru
      _
    // Predicated region
    $region6: #{tpu_custom_call.1} parent=1 // pred_check
      _
    $region7: #{tpu_custom_call.1} parent=1 // pred_check_branch
      %12 = sbr.rel (0) target = $region9
    $region8: #{tpu_custom_call.1} parent=1 // pred_region
      _
    $region9: #{tpu_custom_call.1} parent=1 // pred_fallthru
      _
    // Predicated region
    $region10: #{tpu_custom_call.1} parent=1 // pred_check
      _
    $region11: #{tpu_custom_call.1} parent=1 // pred_check_branch
      %14 = sbr.rel (0) target = $region13
    $region12: #{tpu_custom_call.1} parent=1 // pred_region
      _
    $region13: #{tpu_custom_call.1} parent=1 // pred_fallthru
      _
    %v15 = vld [vmem:[%s0] sm:$0xff]
    %v16 = vld [vmem:[%s0 + $0x8] sm:$0xff]
    %v17 = vld [vmem:[%s0 + $0x10] sm:$0xff]
    %v18 = vld [vmem:[%s0 + $0x18] sm:$0xff]
    %v19 = vld [vmem:[%s0 + $0x20] sm:$0xff]
    %v20 = vld [vmem:[%s0 + $0x28] sm:$0xff]
    %v21 = vld [vmem:[%s0 + $0x30] sm:$0xff]
    %v22 = vld [vmem:[%s0 + $0x38] sm:$0xff]
    %v23 = vld [vmem:[%s0 + $0x40] sm:$0xff]
    %v24 = vld [vmem:[%s0 + $0x48] sm:$0xff]
    %v25 = vld [vmem:[%s0 + $0x50] sm:$0xff]
    %v26 = vld [vmem:[%s0 + $0x58] sm:$0xff]
    %v27 = vld [vmem:[%s0 + $0x60] sm:$0xff]
    %v28 = vld [vmem:[%s0 + $0x68] sm:$0xff]
    %v29 = vld [vmem:[%s0 + $0x70] sm:$0xff]
    %v30 = vld [vmem:[%s0 + $0x78] sm:$0xff]
    %v31 = vld [vmem:[%s0 + $0x80] sm:$0xff]
    %v32 = vld [vmem:[%s0 + $0x88] sm:$0xff]
    %v33 = vld [vmem:[%s0 + $0x90] sm:$0xff]
    %v34 = vld [vmem:[%s0 + $0x98] sm:$0xff]
    %v35 = vld [vmem:[%s0 + $0xa0] sm:$0xff]
    %v36 = vld [vmem:[%s0 + $0xa8] sm:$0xff]
    %v37 = vld [vmem:[%s0 + $0xb0] sm:$0xff]
    %v38 = vld [vmem:[%s0 + $0xb8] sm:$0xff]
    %v39 = vld [vmem:[%s0 + $0xc0] sm:$0xff]
    %v40 = vld [vmem:[%s0 + $0xc8] sm:$0xff]
    %v41 = vld [vmem:[%s0 + $0xd0] sm:$0xff]
    %v42 = vld [vmem:[%s0 + $0xd8] sm:$0xff]
    %v43 = vld [vmem:[%s0 + $0xe0] sm:$0xff]
    %v44 = vld [vmem:[%s0 + $0xe8] sm:$0xff]
    %v45 = vld [vmem:[%s0 + $0xf0] sm:$0xff]
    %v46 = vld [vmem:[%s0 + $0xf8] sm:$0xff]
    %v47 = vld [vmem:[%s0 + $0x100] sm:$0xff]
    %v48 = vld [vmem:[%s0 + $0x108] sm:$0xff]
    %v49 = vld [vmem:[%s0 + $0x110] sm:$0xff]
    %v50 = vld [vmem:[%s0 + $0x118] sm:$0xff]
    %v51 = vld [vmem:[%s0 + $0x120] sm:$0xff]
    %v52 = vld [vmem:[%s0 + $0x128] sm:$0xff]
    %v53 = vld [vmem:[%s0 + $0x130] sm:$0xff]
    %v54 = vld [vmem:[%s0 + $0x138] sm:$0xff]
    %v55 = vld [vmem:[%s0 + $0x140] sm:$0xff]
    %v56 = vld [vmem:[%s0 + $0x148] sm:$0xff]
    %v57 = vld [vmem:[%s0 + $0x150] sm:$0xff]
    %v58 = vld [vmem:[%s0 + $0x158] sm:$0xff]
    %v59 = vld [vmem:[%s0 + $0x160] sm:$0xff]
    %v60 = vld [vmem:[%s0 + $0x168] sm:$0xff]
    %v61 = vld [vmem:[%s0 + $0x170] sm:$0xff]
    %v62 = vld [vmem:[%s0 + $0x178] sm:$0xff]
    %v63 = vld [vmem:[%s0 + $0x180] sm:$0xff]
    %v64 = vld [vmem:[%s0 + $0x188] sm:$0xff]
    %v65 = vld [vmem:[%s0 + $0x190] sm:$0xff]
    %v66 = vld [vmem:[%s0 + $0x198] sm:$0xff]
    %v67 = vld [vmem:[%s0 + $0x1a0] sm:$0xff]
    %v68 = vld [vmem:[%s0 + $0x1a8] sm:$0xff]
    %v69 = vld [vmem:[%s0 + $0x1b0] sm:$0xff]
    %v70 = vld [vmem:[%s0 + $0x1b8] sm:$0xff]
    %v71 = vld [vmem:[%s0 + $0x1c0] sm:$0xff]
    %v72 = vld [vmem:[%s0 + $0x1c8] sm:$0xff]
    %v73 = vld [vmem:[%s0 + $0x1d0] sm:$0xff]
    %v74 = vld [vmem:[%s0 + $0x1d8] sm:$0xff]
    %v75 = vld [vmem:[%s0 + $0x1e0] sm:$0xff]
    %v76 = vld [vmem:[%s0 + $0x1e8] sm:$0xff]
    %v77 = vld [vmem:[%s0 + $0x1f0] sm:$0xff]
    %v78 = vld [vmem:[%s0 + $0x1f8] sm:$0xff]
    %v79 = vld [vmem:[%s0 + $0x200] sm:$0xff]
    %v80 = vld [vmem:[%s0 + $0x208] sm:$0xff]
    %v81 = vld [vmem:[%s0 + $0x210] sm:$0xff]
    %v82 = vld [vmem:[%s0 + $0x218] sm:$0xff]
    %v83 = vld [vmem:[%s0 + $0x220] sm:$0xff]
    %v84 = vld [vmem:[%s0 + $0x228] sm:$0xff]
    %v85 = vld [vmem:[%s0 + $0x230] sm:$0xff]
    %v86 = vld [vmem:[%s0 + $0x238] sm:$0xff]
    %v87 = vld [vmem:[%s0 + $0x240] sm:$0xff]
    %v88 = vld [vmem:[%s0 + $0x248] sm:$0xff]
    %v89 = vld [vmem:[%s0 + $0x250] sm:$0xff]
    %v90 = vld [vmem:[%s0 + $0x258] sm:$0xff]
    %v91 = vld [vmem:[%s0 + $0x260] sm:$0xff]
    %v92 = vld [vmem:[%s0 + $0x268] sm:$0xff]
    %v93 = vld [vmem:[%s0 + $0x270] sm:$0xff]
    %v94 = vld [vmem:[%s0 + $0x278] sm:$0xff]
    %v95 = vld [vmem:[%s0 + $0x280] sm:$0xff]
    %v96 = vld [vmem:[%s0 + $0x288] sm:$0xff]
    %v97 = vld [vmem:[%s0 + $0x290] sm:$0xff]
    %v98 = vld [vmem:[%s0 + $0x298] sm:$0xff]
    %v99 = vld [vmem:[%s0 + $0x2a0] sm:$0xff]
    %v100 = vld [vmem:[%s0 + $0x2a8] sm:$0xff]
    %v101 = vld [vmem:[%s0 + $0x2b0] sm:$0xff]
    %v102 = vld [vmem:[%s0 + $0x2b8] sm:$0xff]
    %v103 = vld [vmem:[%s0 + $0x2c0] sm:$0xff]
    %v104 = vld [vmem:[%s0 + $0x2c8] sm:$0xff]
    %v105 = vld [vmem:[%s0 + $0x2d0] sm:$0xff]
    %v106 = vld [vmem:[%s0 + $0x2d8] sm:$0xff]
    %v107 = vld [vmem:[%s0 + $0x2e0] sm:$0xff]
    %v108 = vld [vmem:[%s0 + $0x2e8] sm:$0xff]
    %v109 = vld [vmem:[%s0 + $0x2f0] sm:$0xff]
    %v110 = vld [vmem:[%s0 + $0x2f8] sm:$0xff]
    %v111 = vld [vmem:[%s2] sm:$0xff]
    %v112 = vld [vmem:[%s2 + $0x8] sm:$0xff]
    %v113 = vld [vmem:[%s2 + $0x10] sm:$0xff]
    %v114 = vld [vmem:[%s2 + $0x18] sm:$0xff]
    %v115 = vld [vmem:[%s2 + $0x20] sm:$0xff]
    %v116 = vld [vmem:[%s2 + $0x28] sm:$0xff]
    %v117 = vld [vmem:[%s2 + $0x30] sm:$0xff]
    %v118 = vld [vmem:[%s2 + $0x38] sm:$0xff]
    %v119 = vld [vmem:[%s2 + $0x40] sm:$0xff]
    %v120 = vld [vmem:[%s2 + $0x48] sm:$0xff]
    %v121 = vld [vmem:[%s2 + $0x50] sm:$0xff]
    %v122 = vld [vmem:[%s1] sm:$0xff]
    %v123 = vld [vmem:[%s1 + $0x8] sm:$0xff]
    %v124 = vld [vmem:[%s1 + $0x10] sm:$0xff]
    %v125 = vld [vmem:[%s1 + $0x18] sm:$0xff]
    %v126 = vld [vmem:[%s1 + $0x20] sm:$0xff]
    %v127 = vld [vmem:[%s1 + $0x28] sm:$0xff]
    %v128 = vld [vmem:[%s1 + $0x30] sm:$0xff]
    %v129 = vld [vmem:[%s1 + $0x38] sm:$0xff]
    %v130 = vld [vmem:[%s1 + $0x40] sm:$0xff]
    %v131 = vld [vmem:[%s1 + $0x48] sm:$0xff]
    %v132 = vld [vmem:[%s1 + $0x50] sm:$0xff]
    %v133 = vld [vmem:[%s1 + $0x58] sm:$0xff]
    %v134 = vld [vmem:[%s1 + $0x60] sm:$0xff]
    %v135 = vld [vmem:[%s1 + $0x68] sm:$0xff]
    %v136 = vld [vmem:[%s1 + $0x70] sm:$0xff]
    %v137 = vld [vmem:[%s1 + $0x78] sm:$0xff]
    %v138 = vld [vmem:[%s1 + $0x80] sm:$0xff]
    %v139 = vld [vmem:[%s1 + $0x88] sm:$0xff]
    %v140 = vld [vmem:[%s1 + $0x90] sm:$0xff]
    %v141 = vld [vmem:[%s1 + $0x98] sm:$0xff]
    %v142 = vld [vmem:[%s1 + $0xa0] sm:$0xff]
    %v143 = vld [vmem:[%s1 + $0xa8] sm:$0xff]
    %v144 = vld [vmem:[%s1 + $0xb0] sm:$0xff]
    %v145 = vld [vmem:[%s1 + $0xb8] sm:$0xff]
    %v146 = vld [vmem:[%s1 + $0xc0] sm:$0xff]
    %v147 = vld [vmem:[%s1 + $0xc8] sm:$0xff]
    %v148 = vld [vmem:[%s1 + $0xd0] sm:$0xff]
    %v149 = vld [vmem:[%s1 + $0xd8] sm:$0xff]
    %v150 = vld [vmem:[%s1 + $0xe0] sm:$0xff]
    %v151 = vld [vmem:[%s1 + $0xe8] sm:$0xff]
    %v152 = vld [vmem:[%s1 + $0xf0] sm:$0xff]
    %v153 = vld [vmem:[%s1 + $0xf8] sm:$0xff]
    %v154 = vld [vmem:[%s1 + $0x100] sm:$0xff]
    %v155 = vld [vmem:[%s1 + $0x108] sm:$0xff]
    %v156 = vld [vmem:[%s1 + $0x110] sm:$0xff]
    %v157 = vld [vmem:[%s1 + $0x118] sm:$0xff]
    %v158 = vld [vmem:[%s1 + $0x120] sm:$0xff]
    %v159 = vld [vmem:[%s1 + $0x128] sm:$0xff]
    %v160 = vld [vmem:[%s1 + $0x130] sm:$0xff]
    %v161 = vld [vmem:[%s1 + $0x138] sm:$0xff]
    %v162 = vld [vmem:[%s1 + $0x140] sm:$0xff]
    %v163 = vld [vmem:[%s1 + $0x148] sm:$0xff]
    %v164 = vld [vmem:[%s1 + $0x150] sm:$0xff]
    %v165 = vld [vmem:[%s1 + $0x158] sm:$0xff]
    %v166 = vld [vmem:[%s1 + $0x160] sm:$0xff]
    %v167 = vld [vmem:[%s1 + $0x168] sm:$0xff]
    %v168 = vld [vmem:[%s1 + $0x170] sm:$0xff]
    %v169 = vld [vmem:[%s1 + $0x178] sm:$0xff]
    %v170 = vld [vmem:[%s1 + $0x180] sm:$0xff]
    %v171 = vld [vmem:[%s1 + $0x188] sm:$0xff]
    %v172 = vld [vmem:[%s1 + $0x190] sm:$0xff]
    %v173 = vld [vmem:[%s1 + $0x198] sm:$0xff]
    %v174 = vld [vmem:[%s1 + $0x1a0] sm:$0xff]
    %v175 = vld [vmem:[%s1 + $0x1a8] sm:$0xff]
    %v176 = vld [vmem:[%s1 + $0x1b0] sm:$0xff]
    %v177 = vld [vmem:[%s1 + $0x1b8] sm:$0xff]
    %v178 = vld [vmem:[%s1 + $0x1c0] sm:$0xff]
    %v179 = vld [vmem:[%s1 + $0x1c8] sm:$0xff]
    %v180 = vld [vmem:[%s1 + $0x1d0] sm:$0xff]
    %v181 = vld [vmem:[%s1 + $0x1d8] sm:$0xff]
    %v182 = vld [vmem:[%s1 + $0x1e0] sm:$0xff]
    %v183 = vld [vmem:[%s1 + $0x1e8] sm:$0xff]
    %v184 = vld [vmem:[%s1 + $0x1f0] sm:$0xff]
    %v185 = vld [vmem:[%s1 + $0x1f8] sm:$0xff]
    %v186 = vld [vmem:[%s1 + $0x200] sm:$0xff]
    %v187 = vld [vmem:[%s1 + $0x208] sm:$0xff]
    %v188 = vld [vmem:[%s1 + $0x210] sm:$0xff]
    %v189 = vld [vmem:[%s1 + $0x218] sm:$0xff]
    %v190 = vld [vmem:[%s1 + $0x220] sm:$0xff]
    %v191 = vld [vmem:[%s1 + $0x228] sm:$0xff]
    %v192 = vld [vmem:[%s1 + $0x230] sm:$0xff]
    %v193 = vld [vmem:[%s1 + $0x238] sm:$0xff]
    %v194 = vld [vmem:[%s1 + $0x240] sm:$0xff]
    %v195 = vld [vmem:[%s1 + $0x248] sm:$0xff]
    %v196 = vld [vmem:[%s1 + $0x250] sm:$0xff]
    %v197 = vld [vmem:[%s1 + $0x258] sm:$0xff]
    %v198 = vld [vmem:[%s1 + $0x260] sm:$0xff]
    %v199 = vld [vmem:[%s1 + $0x268] sm:$0xff]
    %v200 = vld [vmem:[%s1 + $0x270] sm:$0xff]
    %v201 = vld [vmem:[%s1 + $0x278] sm:$0xff]
    %v202 = vld [vmem:[%s1 + $0x280] sm:$0xff]
    %v203 = vld [vmem:[%s1 + $0x288] sm:$0xff]
    %v204 = vld [vmem:[%s1 + $0x290] sm:$0xff]
    %v205 = vld [vmem:[%s1 + $0x298] sm:$0xff]
    %v206 = vld [vmem:[%s1 + $0x2a0] sm:$0xff]
    %v207 = vld [vmem:[%s1 + $0x2a8] sm:$0xff]
    %v208 = vld [vmem:[%s1 + $0x2b0] sm:$0xff]
    %v209 = vld [vmem:[%s1 + $0x2b8] sm:$0xff]
    %v210 = vld [vmem:[%s1 + $0x2c0] sm:$0xff]
    %v211 = vld [vmem:[%s1 + $0x2c8] sm:$0xff]
    %v212 = vld [vmem:[%s1 + $0x2d0] sm:$0xff]
    %v213 = vld [vmem:[%s1 + $0x2d8] sm:$0xff]
    %v214 = vld [vmem:[%s1 + $0x2e0] sm:$0xff]
    %v215 = vld [vmem:[%s1 + $0x2e8] sm:$0xff]
    %v216 = vld [vmem:[%s1 + $0x2f0] sm:$0xff]
    %v217 = vld [vmem:[%s1 + $0x2f8] sm:$0xff]
    %v218 = vlaneseq
    %v219 = vshrl.u32 %v218, 7
    %v220 = vsub.s32 0, %v219
    %v221 = vrot.slane %v121, %v220
    %222 = vmatprep.subr.mxu0 0.0
    %223 = vmatpush1.msra.mxu0 %v137
    %224 = vmatprep.subr.mxu0 0.0
    %225 = vmatpush1.msra.mxu0 %v136
    %226 = vmatprep.subr.mxu0 0.0
    %227 = vmatpush1.msra.mxu0 %v135
    %228 = vmatprep.subr.mxu0 0.0
    %229 = vmatpush1.msra.mxu0 %v134
    %230 = vmatprep.subr.mxu0 0.0
    %231 = vmatpush1.msra.mxu0 %v133
    %232 = vmatprep.subr.mxu0 0.0
    %233 = vmatpush1.msra.mxu0 %v132
    %234 = vmatprep.subr.mxu0 0.0
    %235 = vmatpush1.msra.mxu0 %v131
    %236 = vmatprep.subr.mxu0 0.0
    %237 = vmatpush1.msra.mxu0 %v130
    %238 = vmatprep.subr.mxu0 0.0
    %239 = vmatpush1.msra.mxu0 %v129
    %240 = vmatprep.subr.mxu0 0.0
    %241 = vmatpush1.msra.mxu0 %v128
    %242 = vmatprep.subr.mxu0 0.0
    %243 = vmatpush1.msra.mxu0 %v127
    %244 = vmatprep.subr.mxu0 0.0
    %245 = vmatpush1.msra.mxu0 %v126
    %246 = vmatprep.subr.mxu0 0.0
    %247 = vmatpush1.msra.mxu0 %v125
    %248 = vmatprep.subr.mxu0 0.0
    %249 = vmatpush1.msra.mxu0 %v124
    %250 = vmatprep.subr.mxu0 0.0
    %251 = vmatpush1.msra.mxu0 %v123
    %252 = vmatprep.subr.mxu0 0.0
    %253 = vmatpush1.msra.mxu0 %v122
    %254 = vmatprep.subr.mxu0 0.0
    %255 = vmatpush2.msra.mxu0 %v153
    %256 = vmatprep.subr.mxu0 0.0
    %257 = vmatpush2.msra.mxu0 %v152
    %258 = vmatprep.subr.mxu0 0.0
    %259 = vmatpush2.msra.mxu0 %v151
    %260 = vmatprep.subr.mxu0 0.0
    %261 = vmatpush2.msra.mxu0 %v150
    %262 = vmatprep.subr.mxu0 0.0
    %263 = vmatpush2.msra.mxu0 %v149
    %264 = vmatprep.subr.mxu0 0.0
    %265 = vmatpush2.msra.mxu0 %v148
    %266 = vmatprep.subr.mxu0 0.0
    %267 = vmatpush2.msra.mxu0 %v147
    %268 = vmatprep.subr.mxu0 0.0
    %269 = vmatpush2.msra.mxu0 %v146
    %270 = vmatprep.subr.mxu0 0.0
    %271 = vmatpush2.msra.mxu0 %v145
    %272 = vmatprep.subr.mxu0 0.0
    %273 = vmatpush2.msra.mxu0 %v144
    %274 = vmatprep.subr.mxu0 0.0
    %275 = vmatpush2.msra.mxu0 %v143
    %276 = vmatprep.subr.mxu0 0.0
    %277 = vmatpush2.msra.mxu0 %v142
    %278 = vmatprep.subr.mxu0 0.0
    %279 = vmatpush2.msra.mxu0 %v141
    %280 = vmatprep.subr.mxu0 0.0
    %281 = vmatpush2.msra.mxu0 %v140
    %282 = vmatprep.subr.mxu0 0.0
    %283 = vmatpush2.msra.mxu0 %v139
    %284 = vmatprep.subr.mxu0 0.0
    %285 = vmatpush2.msra.mxu0 %v138
    %286 = vmatprep.mubr.f32.mxu0 %v16
    %287 = vmatmul.mubr.f32.gmra.mxu0 %v15
    %v288 = vpop.f32.mrf.mxu0
    %v289 = vadd.f32 %v221, %v288
    %v290 = vpop.f32.mrf.mxu0
    %291 = vmatprep.mubr.f32.mxu0 %v22
    %292 = vmatmul.mubr.f32.gmra.mxu0 %v21
    %v293 = vpop.f32.mrf.mxu0
    %v294 = vadd.f32 %v221, %v293
    %v295 = vpop.f32.mrf.mxu0
    %296 = vmatprep.mubr.f32.mxu0 %v28
    %297 = vmatmul.mubr.f32.gmra.mxu0 %v27
    %v298 = vpop.f32.mrf.mxu0
    %v299 = vadd.f32 %v221, %v298
    %v300 = vpop.f32.mrf.mxu0
    %301 = vmatprep.mubr.f32.mxu0 %v34
    %302 = vmatmul.mubr.f32.gmra.mxu0 %v33
    %v303 = vpop.f32.mrf.mxu0
    %v304 = vadd.f32 %v221, %v303
    %v305 = vpop.f32.mrf.mxu0
    %306 = vmatprep.mubr.f32.mxu0 %v40
    %307 = vmatmul.mubr.f32.gmra.mxu0 %v39
    %v308 = vpop.f32.mrf.mxu0
    %v309 = vadd.f32 %v221, %v308
    %v310 = vpop.f32.mrf.mxu0
    %311 = vmatprep.mubr.f32.mxu0 %v46
    %312 = vmatmul.mubr.f32.gmra.mxu0 %v45
    %v313 = vpop.f32.mrf.mxu0
    %v314 = vadd.f32 %v221, %v313
    %v315 = vpop.f32.mrf.mxu0
    %316 = vmatprep.mubr.f32.mxu0 %v52
    %317 = vmatmul.mubr.f32.gmra.mxu0 %v51
    %v318 = vpop.f32.mrf.mxu0
    %v319 = vadd.f32 %v221, %v318
    %v320 = vpop.f32.mrf.mxu0
    %321 = vmatprep.mubr.f32.mxu0 %v58
    %322 = vmatmul.mubr.f32.gmra.mxu0 %v57
    %v323 = vpop.f32.mrf.mxu0
    %v324 = vadd.f32 %v221, %v323
    %v325 = vpop.f32.mrf.mxu0
    %326 = vmatprep.mubr.f32.mxu0 %v64
    %327 = vmatmul.mubr.f32.gmra.mxu0 %v63
    %v328 = vpop.f32.mrf.mxu0
    %v329 = vadd.f32 %v221, %v328
    %v330 = vpop.f32.mrf.mxu0
    %331 = vmatprep.mubr.f32.mxu0 %v70
    %332 = vmatmul.mubr.f32.gmra.mxu0 %v69
    %v333 = vpop.f32.mrf.mxu0
    %v334 = vadd.f32 %v221, %v333
    %v335 = vpop.f32.mrf.mxu0
    %336 = vmatprep.mubr.f32.mxu0 %v76
    %337 = vmatmul.mubr.f32.gmra.mxu0 %v75
    %v338 = vpop.f32.mrf.mxu0
    %v339 = vadd.f32 %v221, %v338
    %v340 = vpop.f32.mrf.mxu0
    %341 = vmatprep.mubr.f32.mxu0 %v82
    %342 = vmatmul.mubr.f32.gmra.mxu0 %v81
    %v343 = vpop.f32.mrf.mxu0
    %v344 = vadd.f32 %v221, %v343
    %v345 = vpop.f32.mrf.mxu0
    %346 = vmatprep.mubr.f32.mxu0 %v88
    %347 = vmatmul.mubr.f32.gmra.mxu0 %v87
    %v348 = vpop.f32.mrf.mxu0
    %v349 = vadd.f32 %v221, %v348
    %v350 = vpop.f32.mrf.mxu0
    %351 = vmatprep.mubr.f32.mxu0 %v94
    %352 = vmatmul.mubr.f32.gmra.mxu0 %v93
    %v353 = vpop.f32.mrf.mxu0
    %v354 = vadd.f32 %v221, %v353
    %v355 = vpop.f32.mrf.mxu0
    %356 = vmatprep.mubr.f32.mxu0 %v100
    %357 = vmatmul.mubr.f32.gmra.mxu0 %v99
    %v358 = vpop.f32.mrf.mxu0
    %v359 = vadd.f32 %v221, %v358
    %v360 = vpop.f32.mrf.mxu0
    %361 = vmatprep.mubr.f32.mxu0 %v106
    %362 = vmatmul.mubr.f32.gmra.mxu0 %v105
    %v363 = vpop.f32.mrf.mxu0
    %v364 = vadd.f32 %v221, %v363
    %v365 = vpop.f32.mrf.mxu0
    %366 = vdwg.mxu0
    %367 = vmatprep.subr.mxu0 0.0
    %368 = vmatpush1.msra.mxu0 %v169
    %369 = vmatprep.subr.mxu0 0.0
    %370 = vmatpush1.msra.mxu0 %v168
    %371 = vmatprep.subr.mxu0 0.0
    %372 = vmatpush1.msra.mxu0 %v167
    %373 = vmatprep.subr.mxu0 0.0
    %374 = vmatpush1.msra.mxu0 %v166
    %375 = vmatprep.subr.mxu0 0.0
    %376 = vmatpush1.msra.mxu0 %v165
    %377 = vmatprep.subr.mxu0 0.0
    %378 = vmatpush1.msra.mxu0 %v164
    %379 = vmatprep.subr.mxu0 0.0
    %380 = vmatpush1.msra.mxu0 %v163
    %381 = vmatprep.subr.mxu0 0.0
    %382 = vmatpush1.msra.mxu0 %v162
    %383 = vmatprep.subr.mxu0 0.0
    %384 = vmatpush1.msra.mxu0 %v161
    %385 = vmatprep.subr.mxu0 0.0
    %386 = vmatpush1.msra.mxu0 %v160
    %387 = vmatprep.subr.mxu0 0.0
    %388 = vmatpush1.msra.mxu0 %v159
    %389 = vmatprep.subr.mxu0 0.0
    %390 = vmatpush1.msra.mxu0 %v158
    %391 = vmatprep.subr.mxu0 0.0
    %392 = vmatpush1.msra.mxu0 %v157
    %393 = vmatprep.subr.mxu0 0.0
    %394 = vmatpush1.msra.mxu0 %v156
    %395 = vmatprep.subr.mxu0 0.0
    %396 = vmatpush1.msra.mxu0 %v155
    %397 = vmatprep.subr.mxu0 0.0
    %398 = vmatpush1.msra.mxu0 %v154
    %399 = vmatprep.subr.mxu0 0.0
    %400 = vmatpush2.msra.mxu0 %v185
    %401 = vmatprep.subr.mxu0 0.0
    %402 = vmatpush2.msra.mxu0 %v184
    %403 = vmatprep.subr.mxu0 0.0
    %404 = vmatpush2.msra.mxu0 %v183
    %405 = vmatprep.subr.mxu0 0.0
    %406 = vmatpush2.msra.mxu0 %v182
    %407 = vmatprep.subr.mxu0 0.0
    %408 = vmatpush2.msra.mxu0 %v181
    %409 = vmatprep.subr.mxu0 0.0
    %410 = vmatpush2.msra.mxu0 %v180
    %411 = vmatprep.subr.mxu0 0.0
    %412 = vmatpush2.msra.mxu0 %v179
    %413 = vmatprep.subr.mxu0 0.0
    %414 = vmatpush2.msra.mxu0 %v178
    %415 = vmatprep.subr.mxu0 0.0
    %416 = vmatpush2.msra.mxu0 %v177
    %417 = vmatprep.subr.mxu0 0.0
    %418 = vmatpush2.msra.mxu0 %v176
    %419 = vmatprep.subr.mxu0 0.0
    %420 = vmatpush2.msra.mxu0 %v175
    %421 = vmatprep.subr.mxu0 0.0
    %422 = vmatpush2.msra.mxu0 %v174
    %423 = vmatprep.subr.mxu0 0.0
    %424 = vmatpush2.msra.mxu0 %v173
    %425 = vmatprep.subr.mxu0 0.0
    %426 = vmatpush2.msra.mxu0 %v172
    %427 = vmatprep.subr.mxu0 0.0
    %428 = vmatpush2.msra.mxu0 %v171
    %429 = vmatprep.subr.mxu0 0.0
    %430 = vmatpush2.msra.mxu0 %v170
    %431 = vmatprep.mubr.f32.mxu0 %v18
    %432 = vmatmul.mubr.f32.gmra.mxu0 %v17
    %v433 = vpop.f32.mrf.mxu0
    %v434 = vadd.f32 %v289, %v433
    %v435 = vpop.f32.mrf.mxu0
    %436 = vmatprep.mubr.f32.mxu0 %v24
    %437 = vmatmul.mubr.f32.gmra.mxu0 %v23
    %v438 = vpop.f32.mrf.mxu0
    %v439 = vadd.f32 %v294, %v438
    %v440 = vpop.f32.mrf.mxu0
    %441 = vmatprep.mubr.f32.mxu0 %v30
    %442 = vmatmul.mubr.f32.gmra.mxu0 %v29
    %v443 = vpop.f32.mrf.mxu0
    %v444 = vadd.f32 %v299, %v443
    %v445 = vpop.f32.mrf.mxu0
    %446 = vmatprep.mubr.f32.mxu0 %v36
    %447 = vmatmul.mubr.f32.gmra.mxu0 %v35
    %v448 = vpop.f32.mrf.mxu0
    %v449 = vadd.f32 %v304, %v448
    %v450 = vpop.f32.mrf.mxu0
    %451 = vmatprep.mubr.f32.mxu0 %v42
    %452 = vmatmul.mubr.f32.gmra.mxu0 %v41
    %v453 = vpop.f32.mrf.mxu0
    %v454 = vadd.f32 %v309, %v453
    %v455 = vpop.f32.mrf.mxu0
    %456 = vmatprep.mubr.f32.mxu0 %v48
    %457 = vmatmul.mubr.f32.gmra.mxu0 %v47
    %v458 = vpop.f32.mrf.mxu0
    %v459 = vadd.f32 %v314, %v458
    %v460 = vpop.f32.mrf.mxu0
    %461 = vmatprep.mubr.f32.mxu0 %v54
    %462 = vmatmul.mubr.f32.gmra.mxu0 %v53
    %v463 = vpop.f32.mrf.mxu0
    %v464 = vadd.f32 %v319, %v463
    %v465 = vpop.f32.mrf.mxu0
    %466 = vmatprep.mubr.f32.mxu0 %v60
    %467 = vmatmul.mubr.f32.gmra.mxu0 %v59
    %v468 = vpop.f32.mrf.mxu0
    %v469 = vadd.f32 %v324, %v468
    %v470 = vpop.f32.mrf.mxu0
    %471 = vmatprep.mubr.f32.mxu0 %v66
    %472 = vmatmul.mubr.f32.gmra.mxu0 %v65
    %v473 = vpop.f32.mrf.mxu0
    %v474 = vadd.f32 %v329, %v473
    %v475 = vpop.f32.mrf.mxu0
    %476 = vmatprep.mubr.f32.mxu0 %v72
    %477 = vmatmul.mubr.f32.gmra.mxu0 %v71
    %v478 = vpop.f32.mrf.mxu0
    %v479 = vadd.f32 %v334, %v478
    %v480 = vpop.f32.mrf.mxu0
    %481 = vmatprep.mubr.f32.mxu0 %v78
    %482 = vmatmul.mubr.f32.gmra.mxu0 %v77
    %v483 = vpop.f32.mrf.mxu0
    %v484 = vadd.f32 %v339, %v483
    %v485 = vpop.f32.mrf.mxu0
    %486 = vmatprep.mubr.f32.mxu0 %v84
    %487 = vmatmul.mubr.f32.gmra.mxu0 %v83
    %v488 = vpop.f32.mrf.mxu0
    %v489 = vadd.f32 %v344, %v488
    %v490 = vpop.f32.mrf.mxu0
    %491 = vmatprep.mubr.f32.mxu0 %v90
    %492 = vmatmul.mubr.f32.gmra.mxu0 %v89
    %v493 = vpop.f32.mrf.mxu0
    %v494 = vadd.f32 %v349, %v493
    %v495 = vpop.f32.mrf.mxu0
    %496 = vmatprep.mubr.f32.mxu0 %v96
    %497 = vmatmul.mubr.f32.gmra.mxu0 %v95
    %v498 = vpop.f32.mrf.mxu0
    %v499 = vadd.f32 %v354, %v498
    %v500 = vpop.f32.mrf.mxu0
    %501 = vmatprep.mubr.f32.mxu0 %v102
    %502 = vmatmul.mubr.f32.gmra.mxu0 %v101
    %v503 = vpop.f32.mrf.mxu0
    %v504 = vadd.f32 %v359, %v503
    %v505 = vpop.f32.mrf.mxu0
    %506 = vmatprep.mubr.f32.mxu0 %v108
    %507 = vmatmul.mubr.f32.gmra.mxu0 %v107
    %v508 = vpop.f32.mrf.mxu0
    %v509 = vadd.f32 %v364, %v508
    %v510 = vpop.f32.mrf.mxu0
    %511 = vdwg.mxu0
    %512 = vmatprep.subr.mxu0 0.0
    %513 = vmatpush1.msra.mxu0 %v201
    %514 = vmatprep.subr.mxu0 0.0
    %515 = vmatpush1.msra.mxu0 %v200
    %516 = vmatprep.subr.mxu0 0.0
    %517 = vmatpush1.msra.mxu0 %v199
    %518 = vmatprep.subr.mxu0 0.0
    %519 = vmatpush1.msra.mxu0 %v198
    %520 = vmatprep.subr.mxu0 0.0
    %521 = vmatpush1.msra.mxu0 %v197
    %522 = vmatprep.subr.mxu0 0.0
    %523 = vmatpush1.msra.mxu0 %v196
    %524 = vmatprep.subr.mxu0 0.0
    %525 = vmatpush1.msra.mxu0 %v195
    %526 = vmatprep.subr.mxu0 0.0
    %527 = vmatpush1.msra.mxu0 %v194
    %528 = vmatprep.subr.mxu0 0.0
    %529 = vmatpush1.msra.mxu0 %v193
    %530 = vmatprep.subr.mxu0 0.0
    %531 = vmatpush1.msra.mxu0 %v192
    %532 = vmatprep.subr.mxu0 0.0
    %533 = vmatpush1.msra.mxu0 %v191
    %534 = vmatprep.subr.mxu0 0.0
    %535 = vmatpush1.msra.mxu0 %v190
    %536 = vmatprep.subr.mxu0 0.0
    %537 = vmatpush1.msra.mxu0 %v189
    %538 = vmatprep.subr.mxu0 0.0
    %539 = vmatpush1.msra.mxu0 %v188
    %540 = vmatprep.subr.mxu0 0.0
    %541 = vmatpush1.msra.mxu0 %v187
    %542 = vmatprep.subr.mxu0 0.0
    %543 = vmatpush1.msra.mxu0 %v186
    %544 = vmatprep.subr.mxu0 0.0
    %545 = vmatpush2.msra.mxu0 %v217
    %546 = vmatprep.subr.mxu0 0.0
    %547 = vmatpush2.msra.mxu0 %v216
    %548 = vmatprep.subr.mxu0 0.0
    %549 = vmatpush2.msra.mxu0 %v215
    %550 = vmatprep.subr.mxu0 0.0
    %551 = vmatpush2.msra.mxu0 %v214
    %552 = vmatprep.subr.mxu0 0.0
    %553 = vmatpush2.msra.mxu0 %v213
    %554 = vmatprep.subr.mxu0 0.0
    %555 = vmatpush2.msra.mxu0 %v212
    %556 = vmatprep.subr.mxu0 0.0
    %557 = vmatpush2.msra.mxu0 %v211
    %558 = vmatprep.subr.mxu0 0.0
    %559 = vmatpush2.msra.mxu0 %v210
    %560 = vmatprep.subr.mxu0 0.0
    %561 = vmatpush2.msra.mxu0 %v209
    %562 = vmatprep.subr.mxu0 0.0
    %563 = vmatpush2.msra.mxu0 %v208
    %564 = vmatprep.subr.mxu0 0.0
    %565 = vmatpush2.msra.mxu0 %v207
    %566 = vmatprep.subr.mxu0 0.0
    %567 = vmatpush2.msra.mxu0 %v206
    %568 = vmatprep.subr.mxu0 0.0
    %569 = vmatpush2.msra.mxu0 %v205
    %570 = vmatprep.subr.mxu0 0.0
    %571 = vmatpush2.msra.mxu0 %v204
    %572 = vmatprep.subr.mxu0 0.0
    %573 = vmatpush2.msra.mxu0 %v203
    %574 = vmatprep.subr.mxu0 0.0
    %575 = vmatpush2.msra.mxu0 %v202
    %576 = vmatprep.mubr.f32.mxu0 %v20
    %577 = vmatmul.mubr.f32.gmra.mxu0 %v19
    %v578 = vpop.f32.mrf.mxu0
    %v579 = vadd.f32 %v434, %v578
    %v580 = vpop.f32.mrf.mxu0
    %581 = vmatprep.mubr.f32.mxu0 %v26
    %582 = vmatmul.mubr.f32.gmra.mxu0 %v25
    %v583 = vpop.f32.mrf.mxu0
    %v584 = vadd.f32 %v439, %v583
    %v585 = vpop.f32.mrf.mxu0
    %586 = vmatprep.mubr.f32.mxu0 %v32
    %587 = vmatmul.mubr.f32.gmra.mxu0 %v31
    %v588 = vpop.f32.mrf.mxu0
    %v589 = vadd.f32 %v444, %v588
    %v590 = vpop.f32.mrf.mxu0
    %591 = vmatprep.mubr.f32.mxu0 %v38
    %592 = vmatmul.mubr.f32.gmra.mxu0 %v37
    %v593 = vpop.f32.mrf.mxu0
    %v594 = vadd.f32 %v449, %v593
    %v595 = vpop.f32.mrf.mxu0
    %596 = vmatprep.mubr.f32.mxu0 %v44
    %597 = vmatmul.mubr.f32.gmra.mxu0 %v43
    %v598 = vpop.f32.mrf.mxu0
    %v599 = vadd.f32 %v454, %v598
    %v600 = vpop.f32.mrf.mxu0
    %601 = vmatprep.mubr.f32.mxu0 %v50
    %602 = vmatmul.mubr.f32.gmra.mxu0 %v49
    %v603 = vpop.f32.mrf.mxu0
    %v604 = vadd.f32 %v459, %v603
    %v605 = vpop.f32.mrf.mxu0
    %606 = vmatprep.mubr.f32.mxu0 %v56
    %607 = vmatmul.mubr.f32.gmra.mxu0 %v55
    %v608 = vpop.f32.mrf.mxu0
    %v609 = vadd.f32 %v464, %v608
    %v610 = vpop.f32.mrf.mxu0
    %611 = vmatprep.mubr.f32.mxu0 %v62
    %612 = vmatmul.mubr.f32.gmra.mxu0 %v61
    %v613 = vpop.f32.mrf.mxu0
    %v614 = vadd.f32 %v469, %v613
    %v615 = vpop.f32.mrf.mxu0
    %616 = vmatprep.mubr.f32.mxu0 %v68
    %617 = vmatmul.mubr.f32.gmra.mxu0 %v67
    %v618 = vpop.f32.mrf.mxu0
    %v619 = vadd.f32 %v474, %v618
    %v620 = vpop.f32.mrf.mxu0
    %621 = vmatprep.mubr.f32.mxu0 %v74
    %622 = vmatmul.mubr.f32.gmra.mxu0 %v73
    %v623 = vpop.f32.mrf.mxu0
    %v624 = vadd.f32 %v479, %v623
    %v625 = vpop.f32.mrf.mxu0
    %626 = vmatprep.mubr.f32.mxu0 %v80
    %627 = vmatmul.mubr.f32.gmra.mxu0 %v79
    %v628 = vpop.f32.mrf.mxu0
    %v629 = vadd.f32 %v484, %v628
    %v630 = vpop.f32.mrf.mxu0
    %631 = vmatprep.mubr.f32.mxu0 %v86
    %632 = vmatmul.mubr.f32.gmra.mxu0 %v85
    %v633 = vpop.f32.mrf.mxu0
    %v634 = vadd.f32 %v489, %v633
    %v635 = vpop.f32.mrf.mxu0
    %636 = vmatprep.mubr.f32.mxu0 %v92
    %637 = vmatmul.mubr.f32.gmra.mxu0 %v91
    %v638 = vpop.f32.mrf.mxu0
    %v639 = vadd.f32 %v494, %v638
    %v640 = vpop.f32.mrf.mxu0
    %641 = vmatprep.mubr.f32.mxu0 %v98
    %642 = vmatmul.mubr.f32.gmra.mxu0 %v97
    %v643 = vpop.f32.mrf.mxu0
    %v644 = vadd.f32 %v499, %v643
    %v645 = vpop.f32.mrf.mxu0
    %646 = vmatprep.mubr.f32.mxu0 %v104
    %647 = vmatmul.mubr.f32.gmra.mxu0 %v103
    %v648 = vpop.f32.mrf.mxu0
    %v649 = vadd.f32 %v504, %v648
    %v650 = vpop.f32.mrf.mxu0
    %651 = vmatprep.mubr.f32.mxu0 %v110
    %652 = vmatmul.mubr.f32.gmra.mxu0 %v109
    %v653 = vpop.f32.mrf.mxu0
    %v654 = vadd.f32 %v509, %v653
    %v655 = vpop.f32.mrf.mxu0
    %656 = vdwg.mxu0
    %vm657 = vcmp.gt.f32.partialorder %v579, 0.0
    %vm658 = vcmp.gt.f32.partialorder %v584, 0.0
    %vm659 = vcmp.gt.f32.partialorder %v589, 0.0
    %vm660 = vcmp.gt.f32.partialorder %v594, 0.0
    %vm661 = vcmp.gt.f32.partialorder %v599, 0.0
    %vm662 = vcmp.gt.f32.partialorder %v604, 0.0
    %vm663 = vcmp.gt.f32.partialorder %v609, 0.0
    %vm664 = vcmp.gt.f32.partialorder %v614, 0.0
    %vm665 = vcmp.gt.f32.partialorder %v619, 0.0
    %vm666 = vcmp.gt.f32.partialorder %v624, 0.0
    %vm667 = vcmp.gt.f32.partialorder %v629, 0.0
    %vm668 = vcmp.gt.f32.partialorder %v634, 0.0
    %vm669 = vcmp.gt.f32.partialorder %v639, 0.0
    %vm670 = vcmp.gt.f32.partialorder %v644, 0.0
    %vm671 = vcmp.gt.f32.partialorder %v649, 0.0
    %vm672 = vcmp.gt.f32.partialorder %v654, 0.0
    %v673 = vmin.f32 %v579, 0.0
    %v674 = vmin.f32 %v584, 0.0
    %v675 = vmin.f32 %v589, 0.0
    %v676 = vmin.f32 %v594, 0.0
    %v677 = vmin.f32 %v599, 0.0
    %v678 = vmin.f32 %v604, 0.0
    %v679 = vmin.f32 %v609, 0.0
    %v680 = vmin.f32 %v614, 0.0
    %v681 = vmin.f32 %v619, 0.0
    %v682 = vmin.f32 %v624, 0.0
    %v683 = vmin.f32 %v629, 0.0
    %v684 = vmin.f32 %v634, 0.0
    %v685 = vmin.f32 %v639, 0.0
    %v686 = vmin.f32 %v644, 0.0
    %v687 = vmin.f32 %v649, 0.0
    %v688 = vmin.f32 %v654, 0.0
    %v689 = vmul.f32 %v673, 1.442695
    %v690 = vpow.pop %v689
    %v691 = vmul.f32 %v674, 1.442695
    %v692 = vpow.pop %v691
    %v693 = vmul.f32 %v675, 1.442695
    %v694 = vpow.pop %v693
    %v695 = vmul.f32 %v676, 1.442695
    %v696 = vpow.pop %v695
    %v697 = vmul.f32 %v677, 1.442695
    %v698 = vpow.pop %v697
    %v699 = vmul.f32 %v678, 1.442695
    %v700 = vpow.pop %v699
    %v701 = vmul.f32 %v679, 1.442695
    %v702 = vpow.pop %v701
    %v703 = vmul.f32 %v680, 1.442695
    %v704 = vpow.pop %v703
    %v705 = vmul.f32 %v681, 1.442695
    %v706 = vpow.pop %v705
    %v707 = vmul.f32 %v682, 1.442695
    %v708 = vpow.pop %v707
    %v709 = vmul.f32 %v683, 1.442695
    %v710 = vpow.pop %v709
    %v711 = vmul.f32 %v684, 1.442695
    %v712 = vpow.pop %v711
    %v713 = vmul.f32 %v685, 1.442695
    %v714 = vpow.pop %v713
    %v715 = vmul.f32 %v686, 1.442695
    %v716 = vpow.pop %v715
    %v717 = vmul.f32 %v687, 1.442695
    %v718 = vpow.pop %v717
    %v719 = vmul.f32 %v688, 1.442695
    %v720 = vpow.pop %v719
    %v721 = vsub.f32 %v690, 1.0
    %v722 = vsub.f32 %v692, 1.0
    %v723 = vsub.f32 %v694, 1.0
    %v724 = vsub.f32 %v696, 1.0
    %v725 = vsub.f32 %v698, 1.0
    %v726 = vsub.f32 %v700, 1.0
    %v727 = vsub.f32 %v702, 1.0
    %v728 = vsub.f32 %v704, 1.0
    %v729 = vsub.f32 %v706, 1.0
    %v730 = vsub.f32 %v708, 1.0
    %v731 = vsub.f32 %v710, 1.0
    %v732 = vsub.f32 %v712, 1.0
    %v733 = vsub.f32 %v714, 1.0
    %v734 = vsub.f32 %v716, 1.0
    %v735 = vsub.f32 %v718, 1.0
    %v736 = vsub.f32 %v720, 1.0
    %v737 = vmul.f32 %v721, 1.6732632
    %v738 = vmul.f32 %v722, 1.6732632
    %v739 = vmul.f32 %v723, 1.6732632
    %v740 = vmul.f32 %v724, 1.6732632
    %v741 = vmul.f32 %v725, 1.6732632
    %v742 = vmul.f32 %v726, 1.6732632
    %v743 = vmul.f32 %v727, 1.6732632
    %v744 = vmul.f32 %v728, 1.6732632
    %v745 = vmul.f32 %v729, 1.6732632
    %v746 = vmul.f32 %v730, 1.6732632
    %v747 = vmul.f32 %v731, 1.6732632
    %v748 = vmul.f32 %v732, 1.6732632
    %v749 = vmul.f32 %v733, 1.6732632
    %v750 = vmul.f32 %v734, 1.6732632
    %v751 = vmul.f32 %v735, 1.6732632
    %v752 = vmul.f32 %v736, 1.6732632
    %v753 = vsel %vm657, %v579, %v737
    %v754 = vsel %vm658, %v584, %v738
    %v755 = vsel %vm659, %v589, %v739
    %v756 = vsel %vm660, %v594, %v740
    %v757 = vsel %vm661, %v599, %v741
    %v758 = vsel %vm662, %v604, %v742
    %v759 = vsel %vm663, %v609, %v743
    %v760 = vsel %vm664, %v614, %v744
    %v761 = vsel %vm665, %v619, %v745
    %v762 = vsel %vm666, %v624, %v746
    %v763 = vsel %vm667, %v629, %v747
    %v764 = vsel %vm668, %v634, %v748
    %v765 = vsel %vm669, %v639, %v749
    %v766 = vsel %vm670, %v644, %v750
    %v767 = vsel %vm671, %v649, %v751
    %v768 = vsel %vm672, %v654, %v752
    %v769 = vmul.f32 %v753, 1.050701
    %v770 = vmul.f32 %v754, 1.050701
    %v771 = vmul.f32 %v755, 1.050701
    %v772 = vmul.f32 %v756, 1.050701
    %v773 = vmul.f32 %v757, 1.050701
    %v774 = vmul.f32 %v758, 1.050701
    %v775 = vmul.f32 %v759, 1.050701
    %v776 = vmul.f32 %v760, 1.050701
    %v777 = vmul.f32 %v761, 1.050701
    %v778 = vmul.f32 %v762, 1.050701
    %v779 = vmul.f32 %v763, 1.050701
    %v780 = vmul.f32 %v764, 1.050701
    %v781 = vmul.f32 %v765, 1.050701
    %v782 = vmul.f32 %v766, 1.050701
    %v783 = vmul.f32 %v767, 1.050701
    %v784 = vmul.f32 %v768, 1.050701
    %786 = vset.pattern.permute.xlu0 0
    %787 = vperm.xlu0 %786, %v115
    %v788 = vpop.permute.xlu0 %787
    %791 = vset.pattern.permute.xlu0 0
    %792 = vperm.xlu0 %791, %v116
    %v793 = vpop.permute.xlu0 %792
    %796 = vset.pattern.permute.xlu0 0
    %797 = vperm.xlu0 %796, %v117
    %v798 = vpop.permute.xlu0 %797
    %vm800 = vcmask 818176
    %v802 = vsel %vm800, %v111, 0
    %v805 = vsel %vm800, %v112, 0
    %v808 = vsel %vm800, %v113, 0
    %v811 = vsel %vm800, %v769, 0
    %v814 = vsel %vm800, %v770, 0
    %v817 = vsel %vm800, %v771, 0
    %v820 = vsel %vm800, %v772, 0
    %v823 = vsel %vm800, %v773, 0
    %v826 = vsel %vm800, %v774, 0
    %v829 = vsel %vm800, %v775, 0
    %v832 = vsel %vm800, %v776, 0
    %v835 = vsel %vm800, %v777, 0
    %v838 = vsel %vm800, %v778, 0
    %v841 = vsel %vm800, %v779, 0
    %v844 = vsel %vm800, %v780, 0
    %v847 = vsel %vm800, %v781, 0
    %v850 = vsel %vm800, %v782, 0
    %v853 = vsel %vm800, %v783, 0
    %v856 = vsel %vm800, %v784, 0
    %858 = vmatprep.subr.mxu0 0.0
    %859 = vmatpush1.xpose.msra.mxu0 %v856
    %860 = vmatprep.subr.mxu0 0.0
    %861 = vmatpush1.xpose.msra.mxu0 %v853
    %862 = vmatprep.subr.mxu0 0.0
    %863 = vmatpush1.xpose.msra.mxu0 %v850
    %864 = vmatprep.subr.mxu0 0.0
    %865 = vmatpush1.xpose.msra.mxu0 %v847
    %866 = vmatprep.subr.mxu0 0.0
    %867 = vmatpush1.xpose.msra.mxu0 %v844
    %868 = vmatprep.subr.mxu0 0.0
    %869 = vmatpush1.xpose.msra.mxu0 %v841
    %870 = vmatprep.subr.mxu0 0.0
    %871 = vmatpush1.xpose.msra.mxu0 %v838
    %872 = vmatprep.subr.mxu0 0.0
    %873 = vmatpush1.xpose.msra.mxu0 %v835
    %874 = vmatprep.subr.mxu0 0.0
    %875 = vmatpush1.xpose.msra.mxu0 %v832
    %876 = vmatprep.subr.mxu0 0.0
    %877 = vmatpush1.xpose.msra.mxu0 %v829
    %878 = vmatprep.subr.mxu0 0.0
    %879 = vmatpush1.xpose.msra.mxu0 %v826
    %880 = vmatprep.subr.mxu0 0.0
    %881 = vmatpush1.xpose.msra.mxu0 %v823
    %882 = vmatprep.subr.mxu0 0.0
    %883 = vmatpush1.xpose.msra.mxu0 %v820
    %884 = vmatprep.subr.mxu0 0.0
    %885 = vmatpush1.xpose.msra.mxu0 %v817
    %886 = vmatprep.subr.mxu0 0.0
    %887 = vmatpush1.xpose.msra.mxu0 %v814
    %888 = vmatprep.subr.mxu0 0.0
    %889 = vmatpush1.xpose.msra.mxu0 %v811
    %890 = vmatprep.subr.mxu0 0.0
    %891 = vmatpush2.xpose.msra.mxu0 0.0
    %892 = vmatprep.subr.mxu0 0.0
    %893 = vmatpush2.xpose.msra.mxu0 0.0
    %894 = vmatprep.subr.mxu0 0.0
    %895 = vmatpush2.xpose.msra.mxu0 0.0
    %896 = vmatprep.subr.mxu0 0.0
    %897 = vmatpush2.xpose.msra.mxu0 0.0
    %898 = vmatprep.subr.mxu0 0.0
    %899 = vmatpush2.xpose.msra.mxu0 0.0
    %900 = vmatprep.subr.mxu0 0.0
    %901 = vmatpush2.xpose.msra.mxu0 0.0
    %902 = vmatprep.subr.mxu0 0.0
    %903 = vmatpush2.xpose.msra.mxu0 0.0
    %904 = vmatprep.subr.mxu0 0.0
    %905 = vmatpush2.xpose.msra.mxu0 0.0
    %906 = vmatprep.subr.mxu0 0.0
    %907 = vmatpush2.xpose.msra.mxu0 0.0
    %908 = vmatprep.subr.mxu0 0.0
    %909 = vmatpush2.xpose.msra.mxu0 0.0
    %910 = vmatprep.subr.mxu0 0.0
    %911 = vmatpush2.xpose.msra.mxu0 0.0
    %912 = vmatprep.subr.mxu0 0.0
    %913 = vmatpush2.xpose.msra.mxu0 0.0
    %914 = vmatprep.subr.mxu0 0.0
    %915 = vmatpush2.xpose.msra.mxu0 0.0
    %916 = vmatprep.subr.mxu0 0.0
    %917 = vmatpush2.xpose.msra.mxu0 0.0
    %918 = vmatprep.subr.mxu0 0.0
    %919 = vmatpush2.xpose.msra.mxu0 0.0
    %920 = vmatprep.subr.mxu0 0.0
    %921 = vmatpush2.xpose.msra.mxu0 0.0
    %922 = vmatprep.mubr.f32.mxu0 0.0
    %923 = vmatmul.mubr.f32.gmra.mxu0 %v802
    %v924 = vpop.f32.mrf.mxu0
    %v925 = vadd.f32 %v788, %v924
    %v926 = vpop.f32.mrf.mxu0
    %927 = vmatprep.mubr.f32.mxu0 0.0
    %928 = vmatmul.mubr.f32.gmra.mxu0 %v805
    %v929 = vpop.f32.mrf.mxu0
    %v930 = vadd.f32 %v793, %v929
    %v931 = vpop.f32.mrf.mxu0
    %932 = vmatprep.mubr.f32.mxu0 0.0
    %933 = vmatmul.mubr.f32.gmra.mxu0 %v808
    %v934 = vpop.f32.mrf.mxu0
    %v935 = vadd.f32 %v798, %v934
    %v936 = vpop.f32.mrf.mxu0
    %937 = vdwg.mxu0
    %vm938 = vcmp.gt.f32.partialorder %v925, 0.0
    %vm939 = vcmp.gt.f32.partialorder %v930, 0.0
    %vm940 = vcmp.gt.f32.partialorder %v935, 0.0
    %v941 = vmin.f32 %v925, 0.0
    %v942 = vmin.f32 %v930, 0.0
    %v943 = vmin.f32 %v935, 0.0
    %v944 = vmul.f32 %v941, 1.442695
    %v945 = vpow.pop %v944
    %v946 = vmul.f32 %v942, 1.442695
    %v947 = vpow.pop %v946
    %v948 = vmul.f32 %v943, 1.442695
    %v949 = vpow.pop %v948
    %v950 = vsub.f32 %v945, 1.0
    %v951 = vsub.f32 %v947, 1.0
    %v952 = vsub.f32 %v949, 1.0
    %v953 = vmul.f32 %v950, 1.6732632
    %v954 = vmul.f32 %v951, 1.6732632
    %v955 = vmul.f32 %v952, 1.6732632
    %v956 = vsel %vm938, %v925, %v953
    %v957 = vsel %vm939, %v930, %v954
    %v958 = vsel %vm940, %v935, %v955
    %v959 = vmul.f32 %v956, 1.050701
    %v960 = vmul.f32 %v957, 1.050701
    %v961 = vmul.f32 %v958, 1.050701
    %963 = vset.pattern.permute.xlu0 0
    %964 = vperm.xlu0 %963, %v118
    %v965 = vpop.permute.xlu0 %964
    %vm967 = vcmask 162816
    %v969 = vsel %vm967, %v114, 0
    %vm971 = vcmask 1043456
    %v973 = vsel %vm971, %v961, 0
    %975 = vmatprep.subr.mxu0 0.0
    %976 = vmatpush1.msra.mxu0 0.0
    %977 = vmatprep.subr.mxu0 0.0
    %978 = vmatpush1.msra.mxu0 0.0
    %979 = vmatprep.subr.mxu0 0.0
    %980 = vmatpush1.msra.mxu0 0.0
    %981 = vmatprep.subr.mxu0 0.0
    %982 = vmatpush1.msra.mxu0 0.0
    %983 = vmatprep.subr.mxu0 0.0
    %984 = vmatpush1.msra.mxu0 0.0
    %985 = vmatprep.subr.mxu0 0.0
    %986 = vmatpush1.msra.mxu0 0.0
    %987 = vmatprep.subr.mxu0 0.0
    %988 = vmatpush1.msra.mxu0 0.0
    %989 = vmatprep.subr.mxu0 0.0
    %990 = vmatpush1.msra.mxu0 0.0
    %991 = vmatprep.subr.mxu0 0.0
    %992 = vmatpush1.msra.mxu0 0.0
    %993 = vmatprep.subr.mxu0 0.0
    %994 = vmatpush1.msra.mxu0 0.0
    %995 = vmatprep.subr.mxu0 0.0
    %996 = vmatpush1.msra.mxu0 0.0
    %997 = vmatprep.subr.mxu0 0.0
    %998 = vmatpush1.msra.mxu0 0.0
    %999 = vmatprep.subr.mxu0 0.0
    %1000 = vmatpush1.msra.mxu0 0.0
    %1001 = vmatprep.subr.mxu0 0.0
    %1002 = vmatpush1.msra.mxu0 %v973
    %1003 = vmatprep.subr.mxu0 0.0
    %1004 = vmatpush1.msra.mxu0 %v960
    %1005 = vmatprep.subr.mxu0 0.0
    %1006 = vmatpush1.msra.mxu0 %v959
    %1007 = vmatprep.subr.mxu0 0.0
    %1008 = vmatpush2.msra.mxu0 0.0
    %1009 = vmatprep.subr.mxu0 0.0
    %1010 = vmatpush2.msra.mxu0 0.0
    %1011 = vmatprep.subr.mxu0 0.0
    %1012 = vmatpush2.msra.mxu0 0.0
    %1013 = vmatprep.subr.mxu0 0.0
    %1014 = vmatpush2.msra.mxu0 0.0
    %1015 = vmatprep.subr.mxu0 0.0
    %1016 = vmatpush2.msra.mxu0 0.0
    %1017 = vmatprep.subr.mxu0 0.0
    %1018 = vmatpush2.msra.mxu0 0.0
    %1019 = vmatprep.subr.mxu0 0.0
    %1020 = vmatpush2.msra.mxu0 0.0
    %1021 = vmatprep.subr.mxu0 0.0
    %1022 = vmatpush2.msra.mxu0 0.0
    %1023 = vmatprep.subr.mxu0 0.0
    %1024 = vmatpush2.msra.mxu0 0.0
    %1025 = vmatprep.subr.mxu0 0.0
    %1026 = vmatpush2.msra.mxu0 0.0
    %1027 = vmatprep.subr.mxu0 0.0
    %1028 = vmatpush2.msra.mxu0 0.0
    %1029 = vmatprep.subr.mxu0 0.0
    %1030 = vmatpush2.msra.mxu0 0.0
    %1031 = vmatprep.subr.mxu0 0.0
    %1032 = vmatpush2.msra.mxu0 0.0
    %1033 = vmatprep.subr.mxu0 0.0
    %1034 = vmatpush2.msra.mxu0 0.0
    %1035 = vmatprep.subr.mxu0 0.0
    %1036 = vmatpush2.msra.mxu0 0.0
    %1037 = vmatprep.subr.mxu0 0.0
    %1038 = vmatpush2.msra.mxu0 0.0
    %1039 = vmatprep.mubr.f32.mxu0 0.0
    %1040 = vmatmul.mubr.f32.gmra.mxu0 %v969
    %v1041 = vpop.f32.mrf.mxu0
    %v1042 = vadd.f32 %v965, %v1041
    %v1043 = vpop.f32.mrf.mxu0
    %1044 = vdwg.mxu0
    %vm1045 = vcmp.gt.f32.partialorder %v1042, 0.0
    %v1046 = vmin.f32 %v1042, 0.0
    %v1047 = vmul.f32 %v1046, 1.442695
    %v1048 = vpow.pop %v1047
    %v1049 = vsub.f32 %v1048, 1.0
    %v1050 = vmul.f32 %v1049, 1.6732632
    %v1051 = vsel %vm1045, %v1042, %v1050
    %v1052 = vmul.f32 %v1051, 1.050701
    %1054 = vset.pattern.permute.xlu0 0
    %1055 = vperm.xlu0 %1054, %v119
    %v1056 = vpop.permute.xlu0 %1055
    %v1058 = vmul.f32 %v1056, %v1052
    %v1059 = vsel %vm971, %v1058, 0.0
    %v1060 = vrot.slane %v1059, 4
    %v1061 = vadd.f32 %v1059, %v1060
    %v1062 = vrot.slane %v1061, 2
    %v1063 = vadd.f32 %v1061, %v1062
    %v1064 = vrot.slane %v1063, 1
    %v1065 = vadd.f32 %v1063, %v1064
    %1067 = vset.pattern.permute.xlu0 0
    %1068 = vperm.xlu0 %1067, %v120
    %v1069 = vpop.permute.xlu0 %1068
    %v1071 = vadd.f32 %v1065, %v1069
    %v1072 = vsub.f32 0.0, %v1071
    %v1073 = vmul.f32 %v1072, 1.442695
    %v1074 = vpow.pop %v1073
    %v1075 = vadd.f32 %v1074, 1.0
    %v1076 = vrcp.pop %v1075
    %v1077 = vmul.f32 1.0, %v1076
    %1078 = vst [vmem:[#allocation2] sm:$0x1] %v1077
    // Predicated region
    $region14: #{tpu_custom_call.1} parent=1 // pred_check
      _
    $region15: #{tpu_custom_call.1} parent=1 // pred_check_branch
      %1080 = sbr.rel (0) target = $region17
    $region16: #{tpu_custom_call.1} parent=1 // pred_region
      %s1082 = ssub.s32 16, 16
      %1083 = vsyncadd [#allocation3], %s1082
      %s1085 = sshll.u32 [#allocation2], 4
      %s1086 = int_to_ptr.vmem [resolvable:$true] %s1085
      %1088 = dma.vmem_to_hbm [thread:$0]  %s1086, 16, %s3, [#allocation3]
    $region17: #{tpu_custom_call.1} parent=1 // pred_fallthru
      _
    // Predicated region
    $region18: #{tpu_custom_call.1} parent=1 // pred_check
      _
    $region19: #{tpu_custom_call.1} parent=1 // pred_check_branch
      %1090 = sbr.rel (0) target = $region21
    $region20: #{tpu_custom_call.1} parent=1 // pred_region
      %1091 = dma.done [#allocation3], 16
    $region21: #{tpu_custom_call.1} parent=1 // pred_fallthru
      _
    %1092 = vsyncpa [#allocation3], 1

</llo_original>
